<compile_context>
chip_gen: v6e
topology: v6e:2x2x1
jax: 0.10.0
libtpu: 0.0.40
codegen_flags: <defaults>
</compile_context>

<pallas_src>
import functools

import jax
import jax.numpy as jnp
from jax.experimental import pallas as pl
from jax.experimental.pallas import tpu as pltpu

_LANE = 128
_LANE_WIDTHS = (1024, 512, 256, 128)   # preferred lane (last-dim) widths
_SMALL_ELEMS = 128 * 1024              # <= this many elements: single-block path
_TILE_BYTES_MAX = 4 * 1024 * 1024      # ~4 MiB per buffer (v6e/v7x sweet spot)
_TILE_BYTES_MIN = 512 * 1024           # don't shrink tiles below this
_MIN_STEPS = 4                         # aim for >=4 grid steps (v7x megacore)
_VMEM_LIMIT_BYTES = 48 * 1024 * 1024   # 4 bufs x 4 MiB = 16 MiB << 48 MiB limit


def _clamp_kernel(x_ref, o_ref, *, min_val, max_val):
    x = x_ref[...]
    # Bounds cast once to the input dtype.  For integer inputs with
    # non-integral bounds this differs slightly from torch's promotion
    # semantics; the module defaults (min=0, max=1) are exact in any dtype.
    lo = jnp.asarray(min_val, dtype=x.dtype)
    hi = jnp.asarray(max_val, dtype=x.dtype)
    # torch.clamp(torch.clamp(x, min=lo), max=hi) == min(max(x, lo), hi)
    o_ref[...] = jnp.minimum(jnp.maximum(x, lo), hi)


def _round_up(v, m):
    return -(-v // m) * m


def _choose_block_rows(rows, lane_w, itemsize):
    """Pick block rows: ~2-4 MiB tiles, dtype-aware sublane packing, >=4 steps."""
    pack = max(8, 32 // itemsize)            # 8 (f32) / 16 (bf16) / 32 (int8)
    bytes_per_row = itemsize * lane_w
    max_rows = max(pack, (_TILE_BYTES_MAX // bytes_per_row) // pack * pack)
    min_rows = max(pack, (_TILE_BYTES_MIN // bytes_per_row) // pack * pack)
    target = _round_up(-(-rows // _MIN_STEPS), pack)   # cdiv(rows, 4) rounded up
    return int(max(min_rows, min(max_rows, target)))


def clamp_pallas(x, min_val=0.0, max_val=1.0):
    """Elementwise clamp via a Pallas TPU kernel. Accepts any shape/dtype."""
    orig_shape = x.shape
    dtype = x.dtype
    n = x.size
    if n == 0:
        return x

    kernel = functools.partial(
        _clamp_kernel, min_val=float(min_val), max_val=float(max_val)
    )
    itemsize = jnp.dtype(dtype).itemsize
    x_flat = jnp.reshape(x, (-1,))

    # Largest lane width in {1024, 512, 256, 128} dividing n -> copy-free path.
    lane_w = next((w for w in _LANE_WIDTHS if n % w == 0), None)
    pad = 0
    if lane_w is None:
        # Rare ragged case (n not a multiple of 128): pay one pad + one slice
        # pass.  Typical NN activation sizes never hit this branch.
        lane_w = _LANE
        pad = (-n) % _LANE
        x_flat = jnp.pad(x_flat, (0, pad))

    n_pad = n + pad
    rows = n_pad // lane_w
    x2d = jnp.reshape(x_flat, (rows, lane_w))

    if n_pad <= _SMALL_ELEMS:
        # ---- Small path: one dense whole-array block, no grid ----
        out2d = pl.pallas_call(
            kernel,
            out_shape=jax.ShapeDtypeStruct((rows, lane_w), dtype),
        )(x2d)
    else:
        # ---- Large path: pipelined 1-D grid over rows ----
        br = _choose_block_rows(rows, lane_w, itemsize)
        grid = (pl.cdiv(rows, br),)  # partial trailing block handled by masking
        out2d = pl.pallas_call(
            kernel,
            out_shape=jax.ShapeDtypeStruct((rows, lane_w), dtype),
            grid_spec=pltpu.PrefetchScalarGridSpec(
                num_scalar_prefetch=0,
                grid=grid,
                in_specs=[pl.BlockSpec((br, lane_w), lambda i: (i, 0))],
                out_specs=pl.BlockSpec((br, lane_w), lambda i: (i, 0)),
            ),
            compiler_params=pltpu.CompilerParams(
                dimension_semantics=("parallel",),   # shards grid on v7x's 2 TCs
                vmem_limit_bytes=_VMEM_LIMIT_BYTES,  # covers v5e's 16 MiB default
            ),
        )(x2d)

    out_flat = jnp.reshape(out2d, (-1,))
    if pad:
        out_flat = out_flat[:n]
    return jnp.reshape(out_flat, orig_shape)


if __name__ == "__main__":
    key = jax.random.PRNGKey(0)
    min_val, max_val = 0.0, 1.0  # module defaults (min=0, max=1)

    def ref_clamp(a):
        return jnp.minimum(jnp.maximum(a, jnp.asarray(min_val, a.dtype)),
                           jnp.asarray(max_val, a.dtype))

    # Primary test: NCHW input, small shape (batch=2, channels=4, 16x16).
    x = jax.random.normal(key, (2, 4, 16, 16), dtype=jnp.float32) * 2.0
    out = jax.block_until_ready(clamp_pallas(x, min_val, max_val))
    assert out.shape == x.shape and out.dtype == x.dtype
    assert jnp.allclose(out, ref_clamp(x)), "mismatch (small path, f32)"

    k1, k2, k3 = jax.random.split(key, 3)

    # Grid path, aligned f32 (1M elements -> ~4 grid steps).
    xl = jax.random.normal(k1, (1024, 1024), dtype=jnp.float32) * 3.0
    outl = jax.block_until_ready(clamp_pallas(xl, min_val, max_val))
    assert jnp.allclose(outl, ref_clamp(xl)), "mismatch (grid path, f32)"

    # Grid path, bf16 (exercises dtype-scaled block rows / sublane packing).
    xb = (jax.random.normal(k2, (512, 2048), dtype=jnp.float32) * 3.0).astype(jnp.bfloat16)
    outb = jax.block_until_ready(clamp_pallas(xb, min_val, max_val))
    assert outb.dtype == jnp.bfloat16
    assert jnp.allclose(outb.astype(jnp.float32),
                        ref_clamp(xb).astype(jnp.float32)), "mismatch (grid path, bf16)"

    # Ragged size (n % 128 != 0): pad-to-128 fallback + trailing slice.
    xr = jax.random.normal(k3, (700000,), dtype=jnp.float32) * 3.0
    outr = jax.block_until_ready(clamp_pallas(xr, min_val, max_val))
    assert outr.shape == xr.shape
    assert jnp.allclose(outr, ref_clamp(xr)), "mismatch (ragged path)"

    print("KERNEL_OK")
</pallas_src>

<mosaic_0001>
module attributes {stable_mosaic.version = 11 : i64} {
  func.func @_clamp_kernel(%arg0: memref<2x1024xf32, #tpu.memory_space<vmem>>, %arg1: memref<2x1024xf32, #tpu.memory_space<vmem>>) attributes {dimension_semantics = [], scalar_prefetch = 0 : i64, scratch_operands = 0 : i64, tpu.core_type = #tpu.core_type<tc>} {
    %c0 = arith.constant 0 : index
    %c0_0 = arith.constant 0 : index
    %0 = vector.load %arg0[%c0, %c0_0] : memref<2x1024xf32, #tpu.memory_space<vmem>>, vector<2x1024xf32>
    %cst = arith.constant 0.000000e+00 : f32
    %1 = vector.broadcast %cst : f32 to vector<2x1024xf32>
    %2 = arith.maximumf %0, %1 : vector<2x1024xf32>
    %cst_1 = arith.constant 1.000000e+00 : f32
    %3 = vector.broadcast %cst_1 : f32 to vector<2x1024xf32>
    %4 = arith.minimumf %2, %3 : vector<2x1024xf32>
    %c0_2 = arith.constant 0 : index
    %c0_3 = arith.constant 0 : index
    %5 = vector.load %arg1[%c0_2, %c0_3] : memref<2x1024xf32, #tpu.memory_space<vmem>>, vector<2x1024xf32>
    tpu.vector_store %arg1[%c0_2, %c0_3], %4 {strides = array<i32>} : memref<2x1024xf32, #tpu.memory_space<vmem>>, vector<2x1024xf32>,
    return
  }
}

</mosaic_0001>

<llo_original>
// kernel: tpu_custom_call.1
$region0: #{tpu_custom_call.1}
  #allocation0 [shape = 'u32[]', space=smem, size = 0x4, offset = 0x4, fixed_abs, tag = 'smem constant byte address 0x4 - core index']
  #allocation1 [shape = 'u32[144,128]{1,0:T(1,128)}', space=vmem, size = 0x12000, scoped, tag = 'internal scratch']
  %s0 = inlined_call_operand.hbm [shape: f32[2,1024], index: 0, kind: input, shape index: {}]
  %s1 = inlined_call_operand.hbm [shape: f32[2,1024], index: 1, kind: output, shape index: {}]
  %s2 = sld [smem:[#allocation0]]
  $region18: #{tpu_custom_call.1} parent=0
    _
  %s4 = ssub.s32 1, %s2
  %s5 = scalar_select 0, %s4, %s2
  $region1: #{tpu_custom_call.1} parent=0
    #allocation2 [shape = 'u8[8192]{0}', space=vmem, size = 0x2000, scoped, tag = 'input window, operand 0, single buffered']
    #allocation3 [shape = 's32[1]{0}', space=sflag, size = 0x4, scoped, tag = 'scoped memory for tpu_custom_call.1']
    #allocation4 [shape = 's32[1]{0}', space=sflag, size = 0x4, scoped, tag = 'scoped memory for tpu_custom_call.1']
    #allocation5 [shape = 'u8[8192]{0}', space=vmem, size = 0x2000, scoped, tag = 'output window, operand 0, single buffered']
    %6 = vsyncpa [#allocation3], 0
    %7 = vsyncpa [#allocation4], 0
    // Predicated region
    $region2: #{tpu_custom_call.1} parent=1 // pred_check
      _
    $region3: #{tpu_custom_call.1} parent=1 // pred_check_branch
      %9 = sbr.rel (0) target = $region5
    $region4: #{tpu_custom_call.1} parent=1 // pred_region
      %s11 = ssub.s32 256, 256
      %12 = vsyncadd [#allocation3], %s11
      %s14 = sshll.u32 [#allocation2], 4
      %s15 = int_to_ptr.vmem [resolvable:$true] %s14
      %17 = dma.hbm_to_vmem [thread:$0]  %s0, 256, %s15, [#allocation3]
    $region5: #{tpu_custom_call.1} parent=1 // pred_fallthru
      _
    // Predicated region
    $region6: #{tpu_custom_call.1} parent=1 // pred_check
      _
    $region7: #{tpu_custom_call.1} parent=1 // pred_check_branch
      %19 = sbr.rel (0) target = $region9
    $region8: #{tpu_custom_call.1} parent=1 // pred_region
      %20 = dma.done [#allocation3], 256
    $region9: #{tpu_custom_call.1} parent=1 // pred_fallthru
      _
    %v21 = vld [vmem:[#allocation2] sm:$0xff]
    %v22 = vld [vmem:[#allocation2 + $0x8] sm:$0xff]
    %v23 = vmax.f32 %v21, 0.0
    %v24 = vmax.f32 %v22, 0.0
    %v25 = vmin.f32 %v23, 1.0
    %v26 = vmin.f32 %v24, 1.0
    %27 = vst [vmem:[#allocation5] sm:$0xff] %v25
    %28 = vst [vmem:[#allocation5 + $0x8] sm:$0xff] %v26
    // Predicated region
    $region10: #{tpu_custom_call.1} parent=1 // pred_check
      _
    $region11: #{tpu_custom_call.1} parent=1 // pred_check_branch
      %30 = sbr.rel (0) target = $region13
    $region12: #{tpu_custom_call.1} parent=1 // pred_region
      %s32 = ssub.s32 256, 256
      %33 = vsyncadd [#allocation4], %s32
      %s35 = sshll.u32 [#allocation5], 4
      %s36 = int_to_ptr.vmem [resolvable:$true] %s35
      %38 = dma.vmem_to_hbm [thread:$0]  %s36, 256, %s1, [#allocation4]
    $region13: #{tpu_custom_call.1} parent=1 // pred_fallthru
      _
    // Predicated region
    $region14: #{tpu_custom_call.1} parent=1 // pred_check
      _
    $region15: #{tpu_custom_call.1} parent=1 // pred_check_branch
      %40 = sbr.rel (0) target = $region17
    $region16: #{tpu_custom_call.1} parent=1 // pred_region
      %41 = dma.done [#allocation4], 256
    $region17: #{tpu_custom_call.1} parent=1 // pred_fallthru
      _
    %42 = vsyncpa [#allocation3], 1
    %43 = vsyncpa [#allocation4], 1

</llo_original>
